<compile_context>
chip_gen: v5e
topology: v5e:2x2
jax: 0.10.0
libtpu: 0.0.40
codegen_flags: <defaults>
</compile_context>

<pallas_src>
import jax
import jax.numpy as jnp
from jax import lax
from jax.experimental import pallas as pl
from jax.experimental.pallas import tpu as pltpu

_LANE = 128
_ACC_ROWS = 32  # per-core accumulator block: 4 f32 vregs -> 4 independent add chains


def _round_up(x, m):
    return pl.cdiv(x, m) * m


def _detect_num_cores():
    """TensorCores driven by one pallas_call (megacore). 1 on v5e/v6e."""
    try:
        nc = getattr(jax.devices()[0], "num_cores", None)
        if nc:
            return max(1, min(int(nc), 2))
    except Exception:
        pass
    return 1


def _bce_loss_ref(truth, predict):
    """Plain-JAX BCE (used as small-N fast path and as the test reference)."""
    t = truth.astype(jnp.float32)
    p = predict.astype(jnp.float32)
    loss = -(t * jnp.maximum(jnp.log(p), -100.0)
             + (1.0 - t) * jnp.maximum(jnp.log(1.0 - p), -100.0))
    return jnp.mean(loss)


def _make_bce_kernel(n_valid, tile_rows, num_tiles):
    def kernel(truth_ref, predict_ref, out_ref):
        c = pl.program_id(0)
        i = pl.program_id(1)

        @pl.when(i == 0)
        def _init():
            out_ref[...] = jnp.zeros_like(out_ref)

        # Native-dtype stream, f32 math (matches torch's f32 semantics).
        t = truth_ref[...].astype(jnp.float32)      # (tile_rows, 128)
        p = predict_ref[...].astype(jnp.float32)

        log_p = jnp.maximum(jnp.log(p), -100.0)
        log_1mp = jnp.maximum(jnp.log(1.0 - p), -100.0)
        loss = -(t * log_p + (1.0 - t) * log_1mp)

        def accumulate(x):
            # Fold rows into the (32, 128) accumulator: 4 independent VPU add
            # chains; the reshape only splits the second-minor dim (layout-free).
            out_ref[...] += jnp.sum(x.reshape(-1, _ACC_ROWS, _LANE), axis=0)

        # First element index covered by this *logical* block.
        row0 = (c * num_tiles + i) * tile_rows
        overruns = (row0 + tile_rows) * _LANE > n_valid

        @pl.when(jnp.logical_not(overruns))
        def _full_block():
            accumulate(loss)

        @pl.when(overruns)
        def _tail_block():
            # Mask grid/128-padding elements (their loaded values are
            # unspecified); jnp.where is a select, so garbage/NaN is dropped.
            row_ids = lax.broadcasted_iota(jnp.int32, (tile_rows, _LANE), 0)
            lane_ids = lax.broadcasted_iota(jnp.int32, (tile_rows, _LANE), 1)
            idx = (row0 + row_ids) * _LANE + lane_ids
            accumulate(jnp.where(idx < n_valid, loss, 0.0))

    return kernel


def bce_loss(truth, predict, *, max_tile_rows=2048, num_cores=None,
             min_kernel_elems=262_144):
    """Equivalent of torch.nn.BCELoss()(predict, truth) for 1-D inputs."""
    assert truth.shape == predict.shape and truth.ndim == 1
    n = int(truth.shape[0])
    rows = pl.cdiv(n, _LANE)

    # Small inputs: fixed launch/per-step overhead dominates; XLA's fused
    # elementwise+reduce wins (this also covers rows < one accumulator tile).
    if n < min_kernel_elems or rows < _ACC_ROWS:
        return _bce_loss_ref(truth, predict)

    nc = _detect_num_cores() if num_cores is None else max(1, min(int(num_cores), 2))
    nc = min(nc, max(1, rows // _ACC_ROWS))

    # Tile: >= 2 pipeline steps per core when the data allows, capped at
    # max_tile_rows (2048 rows = 1 MiB f32 / 0.5 MiB bf16 per input block).
    tile_rows = min(_round_up(max_tile_rows, _ACC_ROWS),
                    _round_up(pl.cdiv(rows, 2 * nc), _ACC_ROWS))
    tile_rows = max(tile_rows, _ACC_ROWS)
    num_tiles = pl.cdiv(rows, nc * tile_rows)
    last_block = pl.cdiv(rows, tile_rows) - 1   # clamp target for the index map
    assert nc * num_tiles * tile_rows * _LANE < 2**31, "int32 index overflow"

    # 2-D lane-dense view. N % 128 == 0 -> free bitcast reshape (no HBM copy);
    # otherwise pad to the next multiple of 128 (value irrelevant: the kernel
    # masks by element index) and let XLA fuse the pad into the pallas input.
    if n % _LANE == 0:
        truth_2d = truth.reshape(rows, _LANE)
        predict_2d = predict.reshape(rows, _LANE)
        input_fusion = None
    else:
        pad = rows * _LANE - n
        truth_2d = jnp.pad(truth, (0, pad), constant_values=1).reshape(rows, _LANE)
        predict_2d = jnp.pad(predict, (0, pad), constant_values=1).reshape(rows, _LANE)
        input_fusion = [True, True]

    # Blocks past the last real block (possible when the per-core split rounds
    # up) are clamped in-bounds here; the kernel's index mask zeroes them.
    in_map = lambda c, i: (jnp.minimum(c * num_tiles + i, last_block), 0)

    itemsize = truth_2d.dtype.itemsize + predict_2d.dtype.itemsize
    partial = pl.pallas_call(
        _make_bce_kernel(n, tile_rows, num_tiles),
        out_shape=jax.ShapeDtypeStruct((nc * _ACC_ROWS, _LANE), jnp.float32),
        grid=(nc, num_tiles),
        in_specs=[
            pl.BlockSpec((tile_rows, _LANE), in_map),
            pl.BlockSpec((tile_rows, _LANE), in_map),
        ],
        out_specs=pl.BlockSpec((_ACC_ROWS, _LANE), lambda c, i: (c, 0)),
        compiler_params=pltpu.CompilerParams(
            dimension_semantics=("parallel", "arbitrary"),
            allow_input_fusion=input_fusion,
        ),
        cost_estimate=pl.CostEstimate(
            flops=7 * n,
            transcendentals=2 * n,
            bytes_accessed=rows * _LANE * itemsize + nc * _ACC_ROWS * _LANE * 4,
        ),
    )(truth_2d, predict_2d)

    # Mean reduction: tiny cross-lane sum + divide in plain JAX.
    return jnp.sum(partial) / jnp.float32(n)


if __name__ == "__main__":
    key = jax.random.PRNGKey(0)

    # (N,), kwargs, use_bf16_inputs
    cases = [
        (256,     dict(), False),                                        # module-scale: small-N fast path
        (131_072, dict(min_kernel_elems=0, max_tile_rows=256), False),   # kernel, multi-tile, N % 128 == 0
        (200_000, dict(min_kernel_elems=0, max_tile_rows=256), False),   # kernel, ragged tail -> in-kernel mask
        (131_072, dict(min_kernel_elems=0, max_tile_rows=256), True),    # kernel, native bf16 streaming
    ]

    for idx, (n, kwargs, use_bf16) in enumerate(cases):
        k1, k2 = jax.random.split(jax.random.fold_in(key, idx))
        truth = (jax.random.uniform(k1, (n,)) > 0.5).astype(jnp.float32)
        predict = jax.random.uniform(k2, (n,), minval=1e-3, maxval=1.0 - 1e-3)
        if use_bf16:
            truth = truth.astype(jnp.bfloat16)
            predict = predict.astype(jnp.bfloat16)

        out = bce_loss(truth, predict, **kwargs)
        jax.block_until_ready(out)

        expect = _bce_loss_ref(truth, predict)
        assert jnp.allclose(out, expect, rtol=1e-5, atol=1e-6), (n, out, expect)

    print("KERNEL_OK")
</pallas_src>

<mosaic_0001>
module attributes {stable_mosaic.version = 11 : i64} {
  func.func @kernel(%arg0: i32, %arg1: i32, %arg2: memref<256x128xf32, #tpu.memory_space<vmem>>, %arg3: memref<256x128xf32, #tpu.memory_space<vmem>>, %arg4: memref<32x128xf32, #tpu.memory_space<vmem>>) attributes {dimension_semantics = [#tpu.dimension_semantics<parallel>, #tpu.dimension_semantics<arbitrary>], iteration_bounds = array<i64: 1, 4>, scalar_prefetch = 0 : i64, scratch_operands = 0 : i64, tpu.core_type = #tpu.core_type<tc>, window_params = [{transform_indices = @transform_0, window_bounds = array<i64: 256, 128>}, {transform_indices = @transform_1, window_bounds = array<i64: 256, 128>}, {transform_indices = @transform_2, window_bounds = array<i64: 32, 128>}]} {
    %c0_i32 = arith.constant 0 : i32
    %0 = arith.cmpi eq, %arg1, %c0_i32 : i32
    %1 = arith.extui %0 : i1 to i32
    %c0_i32_0 = arith.constant 0 : i32
    %2 = arith.cmpi ne, %1, %c0_i32_0 : i32
    scf.if %2 {
      %cst_11 = arith.constant 0.000000e+00 : f32
      %31 = vector.broadcast %cst_11 : f32 to vector<32x128xf32>
      %c0_12 = arith.constant 0 : index
      %c0_13 = arith.constant 0 : index
      %32 = vector.load %arg4[%c0_12, %c0_13] : memref<32x128xf32, #tpu.memory_space<vmem>>, vector<32x128xf32>
      tpu.vector_store %arg4[%c0_12, %c0_13], %31 {strides = array<i32>} : memref<32x128xf32, #tpu.memory_space<vmem>>, vector<32x128xf32>,
    } else {
    }
    %c0 = arith.constant 0 : index
    %c0_1 = arith.constant 0 : index
    %3 = vector.load %arg2[%c0, %c0_1] : memref<256x128xf32, #tpu.memory_space<vmem>>, vector<256x128xf32>
    %c0_2 = arith.constant 0 : index
    %c0_3 = arith.constant 0 : index
    %4 = vector.load %arg3[%c0_2, %c0_3] : memref<256x128xf32, #tpu.memory_space<vmem>>, vector<256x128xf32>
    %5 = math.log %4 : vector<256x128xf32>
    %cst = arith.constant -1.000000e+02 : f32
    %6 = vector.broadcast %cst : f32 to vector<256x128xf32>
    %7 = arith.maximumf %5, %6 : vector<256x128xf32>
    %cst_4 = arith.constant 1.000000e+00 : f32
    %8 = vector.broadcast %cst_4 : f32 to vector<256x128xf32>
    %9 = arith.subf %8, %4 : vector<256x128xf32>
    %10 = math.log %9 : vector<256x128xf32>
    %cst_5 = arith.constant -1.000000e+02 : f32
    %11 = vector.broadcast %cst_5 : f32 to vector<256x128xf32>
    %12 = arith.maximumf %10, %11 : vector<256x128xf32>
    %13 = arith.mulf %3, %7 : vector<256x128xf32>
    %cst_6 = arith.constant 1.000000e+00 : f32
    %14 = vector.broadcast %cst_6 : f32 to vector<256x128xf32>
    %15 = arith.subf %14, %3 : vector<256x128xf32>
    %16 = arith.mulf %15, %12 : vector<256x128xf32>
    %17 = arith.addf %13, %16 : vector<256x128xf32>
    %cst_7 = arith.constant 0.000000e+00 : f32
    %18 = vector.broadcast %cst_7 : f32 to vector<256x128xf32>
    %19 = arith.subf %18, %17 : vector<256x128xf32>
    %c4_i32 = arith.constant 4 : i32
    %20 = arith.muli %arg0, %c4_i32 : i32
    %21 = arith.addi %20, %arg1 : i32
    %c256_i32 = arith.constant 256 : i32
    %22 = arith.muli %21, %c256_i32 : i32
    %c256_i32_8 = arith.constant 256 : i32
    %23 = arith.addi %22, %c256_i32_8 : i32
    %c128_i32 = arith.constant 128 : i32
    %24 = arith.muli %23, %c128_i32 : i32
    %c131072_i32 = arith.constant 131072 : i32
    %25 = arith.cmpi sgt, %24, %c131072_i32 : i32
    %true = arith.constant true
    %26 = arith.xori %25, %true : i1
    %27 = arith.extui %26 : i1 to i32
    %c0_i32_9 = arith.constant 0 : i32
    %28 = arith.cmpi ne, %27, %c0_i32_9 : i32
    scf.if %28 {
      %c0_11 = arith.constant 0 : index
      %c0_12 = arith.constant 0 : index
      %31 = vector.load %arg4[%c0_11, %c0_12] : memref<32x128xf32, #tpu.memory_space<vmem>>, vector<32x128xf32>
      %32 = vector.shape_cast %19 : vector<256x128xf32> to vector<8x32x128xf32>
      %cst_13 = arith.constant dense<0.000000e+00> : vector<32x128xf32>
      %33 = vector.multi_reduction <add>, %32, %cst_13 [0] : vector<8x32x128xf32> to vector<32x128xf32>
      %34 = arith.addf %31, %33 : vector<32x128xf32>
      %c0_14 = arith.constant 0 : index
      %c0_15 = arith.constant 0 : index
      %35 = vector.load %arg4[%c0_14, %c0_15] : memref<32x128xf32, #tpu.memory_space<vmem>>, vector<32x128xf32>
      tpu.vector_store %arg4[%c0_14, %c0_15], %34 {strides = array<i32>} : memref<32x128xf32, #tpu.memory_space<vmem>>, vector<32x128xf32>,
    } else {
    }
    %29 = arith.extui %25 : i1 to i32
    %c0_i32_10 = arith.constant 0 : i32
    %30 = arith.cmpi ne, %29, %c0_i32_10 : i32
    scf.if %30 {
      %31 = tpu.iota {dimensions = array<i32: 0>} : vector<256x128xi32>
      %32 = tpu.iota {dimensions = array<i32: 1>} : vector<256x128xi32>
      %33 = vector.broadcast %22 : i32 to vector<256x128xi32>
      %34 = arith.addi %33, %31 : vector<256x128xi32>
      %c128_i32_11 = arith.constant 128 : i32
      %35 = vector.broadcast %c128_i32_11 : i32 to vector<256x128xi32>
      %36 = arith.muli %34, %35 : vector<256x128xi32>
      %37 = arith.addi %36, %32 : vector<256x128xi32>
      %c131072_i32_12 = arith.constant 131072 : i32
      %38 = vector.broadcast %c131072_i32_12 : i32 to vector<256x128xi32>
      %39 = arith.cmpi slt, %37, %38 : vector<256x128xi32>
      %cst_13 = arith.constant 0.000000e+00 : f32
      %40 = vector.broadcast %cst_13 : f32 to vector<256x128xf32>
      %41 = arith.select %39, %19, %40 : vector<256x128xi1>, vector<256x128xf32>
      %c0_14 = arith.constant 0 : index
      %c0_15 = arith.constant 0 : index
      %42 = vector.load %arg4[%c0_14, %c0_15] : memref<32x128xf32, #tpu.memory_space<vmem>>, vector<32x128xf32>
      %43 = vector.shape_cast %41 : vector<256x128xf32> to vector<8x32x128xf32>
      %cst_16 = arith.constant dense<0.000000e+00> : vector<32x128xf32>
      %44 = vector.multi_reduction <add>, %43, %cst_16 [0] : vector<8x32x128xf32> to vector<32x128xf32>
      %45 = arith.addf %42, %44 : vector<32x128xf32>
      %c0_17 = arith.constant 0 : index
      %c0_18 = arith.constant 0 : index
      %46 = vector.load %arg4[%c0_17, %c0_18] : memref<32x128xf32, #tpu.memory_space<vmem>>, vector<32x128xf32>
      tpu.vector_store %arg4[%c0_17, %c0_18], %45 {strides = array<i32>} : memref<32x128xf32, #tpu.memory_space<vmem>>, vector<32x128xf32>,
    } else {
    }
    return
  }
  func.func @transform_0(%arg0: i32, %arg1: i32) -> (i32, i32) {
    %c4_i32 = arith.constant 4 : i32
    %0 = arith.muli %arg0, %c4_i32 : i32
    %1 = arith.addi %0, %arg1 : i32
    %c3_i32 = arith.constant 3 : i32
    %2 = arith.minsi %1, %c3_i32 : i32
    %c0_i32 = arith.constant 0 : i32
    %c0_i32_0 = arith.constant 0 : i32
    return %2, %c0_i32 : i32, i32
  }
  func.func @transform_1(%arg0: i32, %arg1: i32) -> (i32, i32) {
    %c4_i32 = arith.constant 4 : i32
    %0 = arith.muli %arg0, %c4_i32 : i32
    %1 = arith.addi %0, %arg1 : i32
    %c3_i32 = arith.constant 3 : i32
    %2 = arith.minsi %1, %c3_i32 : i32
    %c0_i32 = arith.constant 0 : i32
    %c0_i32_0 = arith.constant 0 : i32
    return %2, %c0_i32 : i32, i32
  }
  func.func @transform_2(%arg0: i32, %arg1: i32) -> (i32, i32) {
    %c0_i32 = arith.constant 0 : i32
    %c0_i32_0 = arith.constant 0 : i32
    return %arg0, %c0_i32 : i32, i32
  }
}

</mosaic_0001>

<llo_original>
// kernel: tpu_custom_call.1
$region0: #{tpu_custom_call.1}
  #allocation0 [shape = 'u32[]', space=smem, size = 0x4, offset = 0x4, fixed_abs, tag = 'smem constant byte address 0x4 - core index']
  #allocation1 [shape = 'u32[72,128]{1,0:T(1,128)}', space=vmem, size = 0x9000, scoped, tag = 'internal scratch']
  %s0 = inlined_call_operand.hbm [shape: f32[1024,128], index: 0, kind: input, shape index: {}]
  %s1 = inlined_call_operand.hbm [shape: f32[1024,128], index: 1, kind: input, shape index: {}]
  %s2 = inlined_call_operand.hbm [shape: f32[32,128], index: 2, kind: output, shape index: {}]
  %s3 = sld [smem:[#allocation0]]
  $region61: #{tpu_custom_call.1} parent=0
    _
  %s5 = ssub.s32 1, %s3
  %s6 = scalar_select 0, %s5, %s3
  $region1: #{tpu_custom_call.1} parent=0
    #allocation2 [shape = 'u8[262144]{0}', space=vmem, size = 0x40000, scoped, tag = 'input window, operand 0']
    #allocation3 [shape = 's32[2]{0}', space=sflag, size = 0x8, scoped, tag = 'scoped memory for tpu_custom_call.1']
    #allocation4 [shape = 's32[2]{0}', space=sflag, size = 0x8, scoped, tag = 'scoped memory for tpu_custom_call.1']
    #allocation5 [shape = 'u8[262144]{0}', space=vmem, size = 0x40000, scoped, tag = 'input window, operand 1']
    #allocation6 [shape = 's32[2]{0}', space=sflag, size = 0x8, scoped, tag = 'scoped memory for tpu_custom_call.1']
    #allocation7 [shape = 'u8[16384]{0}', space=vmem, size = 0x4000, scoped, tag = 'output window, operand 0, single buffered']
    %7 = vsyncpa [#allocation3], 0
    %s8 = scalar_lea.sflag [#allocation3], 1
    %9 = vsyncpa %s8, 0
    %10 = vsyncpa [#allocation6], 0
    %s11 = scalar_lea.sflag [#allocation6], 1
    %12 = vsyncpa %s11, 0
    %13 = vsyncpa [#allocation4], 0
    loop: start=0, step=1, limit=6
    $region2: #{tpu_custom_call.1} parent=1 // loop_pre_header
      _
    $region3: #{tpu_custom_call.1} parent=1 // loop_header
      %s15 = sphi 0, %s19
      %p16 = scmp.ge.s32.totalorder %s15, 6
      %s22 = sphi 0, %s34
      %s23 = sphi 0, %s30
      %s24 = sphi 0, %s22
      %s25 = sphi 0, %s23
      %s26 = sphi 0, %s24
      %s27 = sphi 0, %s25
      %s45 = sphi 0, %s47
      %s48 = sphi 0, %s45
      %s49 = sphi 0, %s48
      %s65 = sphi 0, %s49
      %s79 = sphi 0, %s81
      %s82 = sphi 0, %s79
      %s83 = sphi 0, %s82
      %s99 = sphi 0, %s83
      %s105 = sphi 0, %s107
      %s108 = sphi 0, %s105
      %s109 = sphi 0, %s108
      %s125 = sphi 0, %s109
    $region4: #{tpu_custom_call.1} parent=1 // loop_header_branch
      %18 = sbr.rel (%p16) target = $region8
    $region5: #{tpu_custom_call.1} parent=1 // loop_body
      %s20 = ssub.s32 %s15, 1
      %s21 = ssub.s32 %s15, 2
      %s28 = sadd.s32 1, %s23
      %p29 = scmp.ge.s32.totalorder %s28, 4
      %s30 = scalar_select %p29, 0, %s28
      %s31 = sadd.s32 1, %s22
      %s32 = scalar_select %p29, %s31, %s22
      %p33 = scmp.ge.s32.totalorder %s32, 1
      %s34 = scalar_select %p33, 0, %s32
      %s35 = smul.u32 %s22, 4
      %s36 = sadd.s32 %s35, %s23
      %p37 = scmp.lt.s32.totalorder %s36, 3
      %s38 = scalar_select %p37, %s36, 3
      %s39 = smul.u32 %s34, 4
      %s40 = sadd.s32 %s39, %s30
      %p41 = scmp.lt.s32.totalorder %s40, 3
      %s42 = scalar_select %p41, %s40, 3
      %s43 = ssub.s32 %s38, %s42
      %p44 = scmp.eq.s32.totalorder %s43, 0
      %s46 = sadd.s32 %s45, 1
      %s47 = scalar_select %p44, %s45, %s46
      %p50 = pneg %p44
      %p51 = scmp.eq.s32.totalorder %s15, 3
      %p52 = por %p50, %p51
      %p53 = scmp.ne.s32.totalorder %s45, %s48
      %p54 = scmp.eq.s32.totalorder %s15, 0
      %p55 = por %p53, %p54
      %p56 = scmp.ne.s32.totalorder %s45, %s48
      %p57 = scmp.eq.s32.totalorder %s20, 3
      %p58 = por %p56, %p57
      %p59 = scmp.ne.s32.totalorder %s48, %s49
      %p60 = scmp.eq.s32.totalorder %s20, 0
      %p61 = por %p59, %p60
      %p62 = scmp.ne.s32.totalorder %s48, %s49
      %p63 = scmp.eq.s32.totalorder %s21, 3
      %p64 = por %p62, %p63
      %p66 = scmp.ne.s32.totalorder %s49, %s65
      %p67 = scmp.eq.s32.totalorder %s21, 0
      %p68 = por %p66, %p67
      %s69 = smul.u32 %s22, 4
      %s70 = sadd.s32 %s69, %s23
      %p71 = scmp.lt.s32.totalorder %s70, 3
      %s72 = scalar_select %p71, %s70, 3
      %s73 = smul.u32 %s34, 4
      %s74 = sadd.s32 %s73, %s30
      %p75 = scmp.lt.s32.totalorder %s74, 3
      %s76 = scalar_select %p75, %s74, 3
      %s77 = ssub.s32 %s72, %s76
      %p78 = scmp.eq.s32.totalorder %s77, 0
      %s80 = sadd.s32 %s79, 1
      %s81 = scalar_select %p78, %s79, %s80
      %p84 = pneg %p78
      %p85 = scmp.eq.s32.totalorder %s15, 3
      %p86 = por %p84, %p85
      %p87 = scmp.ne.s32.totalorder %s79, %s82
      %p88 = scmp.eq.s32.totalorder %s15, 0
      %p89 = por %p87, %p88
      %p90 = scmp.ne.s32.totalorder %s79, %s82
      %p91 = scmp.eq.s32.totalorder %s20, 3
      %p92 = por %p90, %p91
      %p93 = scmp.ne.s32.totalorder %s82, %s83
      %p94 = scmp.eq.s32.totalorder %s20, 0
      %p95 = por %p93, %p94
      %p96 = scmp.ne.s32.totalorder %s82, %s83
      %p97 = scmp.eq.s32.totalorder %s21, 3
      %p98 = por %p96, %p97
      %p100 = scmp.ne.s32.totalorder %s83, %s99
      %p101 = scmp.eq.s32.totalorder %s21, 0
      %p102 = por %p100, %p101
      %s103 = ssub.s32 %s22, %s34
      %p104 = scmp.eq.s32.totalorder %s103, 0
      %s106 = sadd.s32 %s105, 1
      %s107 = scalar_select %p104, %s105, %s106
      %p110 = pneg %p104
      %p111 = scmp.eq.s32.totalorder %s15, 3
      %p112 = por %p110, %p111
      %p113 = scmp.ne.s32.totalorder %s105, %s108
      %p114 = scmp.eq.s32.totalorder %s15, 0
      %p115 = por %p113, %p114
      %p116 = scmp.ne.s32.totalorder %s105, %s108
      %p117 = scmp.eq.s32.totalorder %s20, 3
      %p118 = por %p116, %p117
      %p119 = scmp.ne.s32.totalorder %s108, %s109
      %p120 = scmp.eq.s32.totalorder %s20, 0
      %p121 = por %p119, %p120
      %p122 = scmp.ne.s32.totalorder %s108, %s109
      %p123 = scmp.eq.s32.totalorder %s21, 3
      %p124 = por %p122, %p123
      %p126 = scmp.ne.s32.totalorder %s109, %s125
      %p127 = scmp.eq.s32.totalorder %s21, 0
      %p128 = por %p126, %p127
      %p129 = scmp.le.s32.totalorder 1, %s15
      %p130 = scmp.lt.s32.totalorder %s15, 5
      %p131 = pnand %p129, %p130
      %p132 = pneg %p131
      // Predicated region
      $region9: #{tpu_custom_call.1} parent=5 // pred_check
        _
      $region10: #{tpu_custom_call.1} parent=5 // pred_check_branch
        %134 = sbr.rel (%p131) target = $region12
      $region11: #{tpu_custom_call.1} parent=5 // pred_region
        %s135 = ssub.s32 %s15, 1
      $region12: #{tpu_custom_call.1} parent=5 // pred_fallthru
        _
      %p136 = scmp.lt.s32.totalorder %s15, 4
      // Predicated region
      $region13: #{tpu_custom_call.1} parent=5 // pred_check
        %p137 = pneg %p136
      $region14: #{tpu_custom_call.1} parent=5 // pred_check_branch
        %139 = sbr.rel (%p137) target = $region16
      $region15: #{tpu_custom_call.1} parent=5 // pred_region
        // Predicated region
        $region17: #{tpu_custom_call.1} parent=15 // pred_check
          %p140 = pneg %p55
        $region18: #{tpu_custom_call.1} parent=15 // pred_check_branch
          %142 = sbr.rel (%p140) target = $region20
        $region19: #{tpu_custom_call.1} parent=15 // pred_region
          %s143 = sand.u32 %s45, 1
          %s144 = scalar_lea.sflag [#allocation3], %s143
          %s145 = sand.u32 %s45, 1
          %s146 = smul.addr %s145, 256
          %s147 = scalar_lea.vmem [#allocation2], %s146
          %s148 = smul.u32 %s22, 4
          %s149 = sadd.s32 %s148, %s23
          %p150 = scmp.lt.s32.totalorder %s149, 3
          %s151 = scalar_select %p150, %s149, 3
          %s152 = smul.u32 32, %s151
          %154 = vsyncadd %s144, 0
          %s155 = smul.addr %s152, 8
          %s156 = scalar_lea.hbm %s0, %s155
          %s157 = sshll.u32 %s156, 4
          %s158 = int_to_ptr.hbm [resolvable:$true] %s157
          %s159 = sshll.u32 %s147, 4
          %s160 = int_to_ptr.vmem [resolvable:$true] %s159
          %165 = dma.hbm_to_vmem [thread:$0]  %s158, 4096, %s160, %s144, 128, 128, 8
        $region20: #{tpu_custom_call.1} parent=15 // pred_fallthru
          _
        // Predicated region
        $region21: #{tpu_custom_call.1} parent=15 // pred_check
          %p166 = pneg %p89
        $region22: #{tpu_custom_call.1} parent=15 // pred_check_branch
          %168 = sbr.rel (%p166) target = $region24
        $region23: #{tpu_custom_call.1} parent=15 // pred_region
          %s169 = sand.u32 %s79, 1
          %s170 = scalar_lea.sflag [#allocation6], %s169
          %s171 = sand.u32 %s79, 1
          %s172 = smul.addr %s171, 256
          %s173 = scalar_lea.vmem [#allocation5], %s172
          %s174 = smul.u32 %s22, 4
          %s175 = sadd.s32 %s174, %s23
          %p176 = scmp.lt.s32.totalorder %s175, 3
          %s177 = scalar_select %p176, %s175, 3
          %s178 = smul.u32 32, %s177
          %180 = vsyncadd %s170, 0
          %s181 = smul.addr %s178, 8
          %s182 = scalar_lea.hbm %s1, %s181
          %s183 = sshll.u32 %s182, 4
          %s184 = int_to_ptr.hbm [resolvable:$true] %s183
          %s185 = sshll.u32 %s173, 4
          %s186 = int_to_ptr.vmem [resolvable:$true] %s185
          %191 = dma.hbm_to_vmem [thread:$0]  %s184, 4096, %s186, %s170, 128, 128, 8
        $region24: #{tpu_custom_call.1} parent=15 // pred_fallthru
          _
      $region16: #{tpu_custom_call.1} parent=5 // pred_fallthru
        _
      %p192 = scmp.le.s32.totalorder 1, %s15
      %p193 = scmp.lt.s32.totalorder %s15, 5
      %p194 = pnand %p192, %p193
      %p195 = pneg %p194
      // Predicated region
      $region25: #{tpu_custom_call.1} parent=5 // pred_check
        _
      $region26: #{tpu_custom_call.1} parent=5 // pred_check_branch
        %197 = sbr.rel (%p194) target = $region28
      $region27: #{tpu_custom_call.1} parent=5 // pred_region
        %s198 = ssub.s32 %s15, 1
        %s199 = sand.u32 %s48, 1
        %s200 = scalar_lea.sflag [#allocation3], %s199
        %s201 = sand.u32 %s48, 1
        %s202 = smul.addr %s201, 256
        %s203 = scalar_lea.vmem [#allocation2], %s202
        // Predicated region
        $region29: #{tpu_custom_call.1} parent=27 // pred_check
          %p204 = pneg %p61
        $region30: #{tpu_custom_call.1} parent=27 // pred_check_branch
          %206 = sbr.rel (%p204) target = $region32
        $region31: #{tpu_custom_call.1} parent=27 // pred_region
          %208 = dma.done %s200, 4096
        $region32: #{tpu_custom_call.1} parent=27 // pred_fallthru
          _
        %s209 = sand.u32 %s82, 1
        %s210 = scalar_lea.sflag [#allocation6], %s209
        %s211 = sand.u32 %s82, 1
        %s212 = smul.addr %s211, 256
        %s213 = scalar_lea.vmem [#allocation5], %s212
        // Predicated region
        $region33: #{tpu_custom_call.1} parent=27 // pred_check
          %p214 = pneg %p95
        $region34: #{tpu_custom_call.1} parent=27 // pred_check_branch
          %216 = sbr.rel (%p214) target = $region36
        $region35: #{tpu_custom_call.1} parent=27 // pred_region
          %218 = dma.done %s210, 4096
        $region36: #{tpu_custom_call.1} parent=27 // pred_fallthru
          _
        %s219 = sand.u32 %s48, 1
        %s220 = scalar_lea.sflag [#allocation3], %s219
        %s221 = sand.u32 %s48, 1
        %s222 = smul.addr %s221, 256
        %s223 = scalar_lea.vmem [#allocation2], %s222
        %p224 = pneg %p61
        %p225 = pneg %p58
        %s226 = sand.u32 %s82, 1
        %s227 = scalar_lea.sflag [#allocation6], %s226
        %s228 = sand.u32 %s82, 1
        %s229 = smul.addr %s228, 256
        %s230 = scalar_lea.vmem [#allocation5], %s229
        %p231 = pneg %p95
        %p232 = pneg %p92
        %p233 = pneg %p121
        %p234 = pneg %p118
        %s235 = smul.u32 %s24, 4
        %s236 = sadd.s32 %s235, %s25
        %p237 = scmp.lt.s32.totalorder %s236, 3
        %s238 = scalar_select %p237, %s236, 3
        %s239 = smul.u32 32, %s238
        %s240 = smul.u32 %s24, 4
        %s241 = sadd.s32 %s240, %s25
        %p242 = scmp.lt.s32.totalorder %s241, 3
        %s243 = scalar_select %p242, %s241, 3
        %s244 = smul.u32 32, %s243
        %s245 = smul.u32 4, %s24
        %p246 = scmp.eq.s32.totalorder %s25, 0
        // Predicated region
        $region37: #{tpu_custom_call.1} parent=27 // pred_check
          %p247 = pneg %p246
        $region38: #{tpu_custom_call.1} parent=27 // pred_check_branch
          %249 = sbr.rel (%p247) target = $region40
        $region39: #{tpu_custom_call.1} parent=27 // pred_region
          %250 = vst [vmem:[#allocation7] sm:$0xff] 0.0
          %251 = vst [vmem:[#allocation7 + $0x8] sm:$0xff] 0.0
          %252 = vst [vmem:[#allocation7 + $0x10] sm:$0xff] 0.0
          %253 = vst [vmem:[#allocation7 + $0x18] sm:$0xff] 0.0
        $region40: #{tpu_custom_call.1} parent=27 // pred_fallthru
          _
        %v254 = vld [vmem:[%s203] sm:$0xff]
        %v255 = vld [vmem:[%s203 + $0x8] sm:$0xff]
        %v256 = vld [vmem:[%s203 + $0x10] sm:$0xff]
        %v257 = vld [vmem:[%s203 + $0x18] sm:$0xff]
        %v258 = vld [vmem:[%s203 + $0x20] sm:$0xff]
        %v259 = vld [vmem:[%s203 + $0x28] sm:$0xff]
        %v260 = vld [vmem:[%s203 + $0x30] sm:$0xff]
        %v261 = vld [vmem:[%s203 + $0x38] sm:$0xff]
        %v262 = vld [vmem:[%s203 + $0x40] sm:$0xff]
        %v263 = vld [vmem:[%s203 + $0x48] sm:$0xff]
        %v264 = vld [vmem:[%s203 + $0x50] sm:$0xff]
        %v265 = vld [vmem:[%s203 + $0x58] sm:$0xff]
        %v266 = vld [vmem:[%s203 + $0x60] sm:$0xff]
        %v267 = vld [vmem:[%s203 + $0x68] sm:$0xff]
        %v268 = vld [vmem:[%s203 + $0x70] sm:$0xff]
        %v269 = vld [vmem:[%s203 + $0x78] sm:$0xff]
        %v270 = vld [vmem:[%s203 + $0x80] sm:$0xff]
        %v271 = vld [vmem:[%s203 + $0x88] sm:$0xff]
        %v272 = vld [vmem:[%s203 + $0x90] sm:$0xff]
        %v273 = vld [vmem:[%s203 + $0x98] sm:$0xff]
        %v274 = vld [vmem:[%s203 + $0xa0] sm:$0xff]
        %v275 = vld [vmem:[%s203 + $0xa8] sm:$0xff]
        %v276 = vld [vmem:[%s203 + $0xb0] sm:$0xff]
        %v277 = vld [vmem:[%s203 + $0xb8] sm:$0xff]
        %v278 = vld [vmem:[%s203 + $0xc0] sm:$0xff]
        %v279 = vld [vmem:[%s203 + $0xc8] sm:$0xff]
        %v280 = vld [vmem:[%s203 + $0xd0] sm:$0xff]
        %v281 = vld [vmem:[%s203 + $0xd8] sm:$0xff]
        %v282 = vld [vmem:[%s203 + $0xe0] sm:$0xff]
        %v283 = vld [vmem:[%s203 + $0xe8] sm:$0xff]
        %v284 = vld [vmem:[%s203 + $0xf0] sm:$0xff]
        %v285 = vld [vmem:[%s203 + $0xf8] sm:$0xff]
        %v286 = vld [vmem:[%s213] sm:$0xff]
        %v287 = vld [vmem:[%s213 + $0x8] sm:$0xff]
        %v288 = vld [vmem:[%s213 + $0x10] sm:$0xff]
        %v289 = vld [vmem:[%s213 + $0x18] sm:$0xff]
        %v290 = vld [vmem:[%s213 + $0x20] sm:$0xff]
        %v291 = vld [vmem:[%s213 + $0x28] sm:$0xff]
        %v292 = vld [vmem:[%s213 + $0x30] sm:$0xff]
        %v293 = vld [vmem:[%s213 + $0x38] sm:$0xff]
        %v294 = vld [vmem:[%s213 + $0x40] sm:$0xff]
        %v295 = vld [vmem:[%s213 + $0x48] sm:$0xff]
        %v296 = vld [vmem:[%s213 + $0x50] sm:$0xff]
        %v297 = vld [vmem:[%s213 + $0x58] sm:$0xff]
        %v298 = vld [vmem:[%s213 + $0x60] sm:$0xff]
        %v299 = vld [vmem:[%s213 + $0x68] sm:$0xff]
        %v300 = vld [vmem:[%s213 + $0x70] sm:$0xff]
        %v301 = vld [vmem:[%s213 + $0x78] sm:$0xff]
        %v302 = vld [vmem:[%s213 + $0x80] sm:$0xff]
        %v303 = vld [vmem:[%s213 + $0x88] sm:$0xff]
        %v304 = vld [vmem:[%s213 + $0x90] sm:$0xff]
        %v305 = vld [vmem:[%s213 + $0x98] sm:$0xff]
        %v306 = vld [vmem:[%s213 + $0xa0] sm:$0xff]
        %v307 = vld [vmem:[%s213 + $0xa8] sm:$0xff]
        %v308 = vld [vmem:[%s213 + $0xb0] sm:$0xff]
        %v309 = vld [vmem:[%s213 + $0xb8] sm:$0xff]
        %v310 = vld [vmem:[%s213 + $0xc0] sm:$0xff]
        %v311 = vld [vmem:[%s213 + $0xc8] sm:$0xff]
        %v312 = vld [vmem:[%s213 + $0xd0] sm:$0xff]
        %v313 = vld [vmem:[%s213 + $0xd8] sm:$0xff]
        %v314 = vld [vmem:[%s213 + $0xe0] sm:$0xff]
        %v315 = vld [vmem:[%s213 + $0xe8] sm:$0xff]
        %v316 = vld [vmem:[%s213 + $0xf0] sm:$0xff]
        %v317 = vld [vmem:[%s213 + $0xf8] sm:$0xff]
        %v318 = vlog2.pop %v286
        %v319 = vmul.f32 %v318, 0.6931472
        %v320 = vlog2.pop %v287
        %v321 = vmul.f32 %v320, 0.6931472
        %v322 = vlog2.pop %v288
        %v323 = vmul.f32 %v322, 0.6931472
        %v324 = vlog2.pop %v289
        %v325 = vmul.f32 %v324, 0.6931472
        %v326 = vlog2.pop %v290
        %v327 = vmul.f32 %v326, 0.6931472
        %v328 = vlog2.pop %v291
        %v329 = vmul.f32 %v328, 0.6931472
        %v330 = vlog2.pop %v292
        %v331 = vmul.f32 %v330, 0.6931472
        %v332 = vlog2.pop %v293
        %v333 = vmul.f32 %v332, 0.6931472
        %v334 = vlog2.pop %v294
        %v335 = vmul.f32 %v334, 0.6931472
        %v336 = vlog2.pop %v295
        %v337 = vmul.f32 %v336, 0.6931472
        %v338 = vlog2.pop %v296
        %v339 = vmul.f32 %v338, 0.6931472
        %v340 = vlog2.pop %v297
        %v341 = vmul.f32 %v340, 0.6931472
        %v342 = vlog2.pop %v298
        %v343 = vmul.f32 %v342, 0.6931472
        %v344 = vlog2.pop %v299
        %v345 = vmul.f32 %v344, 0.6931472
        %v346 = vlog2.pop %v300
        %v347 = vmul.f32 %v346, 0.6931472
        %v348 = vlog2.pop %v301
        %v349 = vmul.f32 %v348, 0.6931472
        %v350 = vlog2.pop %v302
        %v351 = vmul.f32 %v350, 0.6931472
        %v352 = vlog2.pop %v303
        %v353 = vmul.f32 %v352, 0.6931472
        %v354 = vlog2.pop %v304
        %v355 = vmul.f32 %v354, 0.6931472
        %v356 = vlog2.pop %v305
        %v357 = vmul.f32 %v356, 0.6931472
        %v358 = vlog2.pop %v306
        %v359 = vmul.f32 %v358, 0.6931472
        %v360 = vlog2.pop %v307
        %v361 = vmul.f32 %v360, 0.6931472
        %v362 = vlog2.pop %v308
        %v363 = vmul.f32 %v362, 0.6931472
        %v364 = vlog2.pop %v309
        %v365 = vmul.f32 %v364, 0.6931472
        %v366 = vlog2.pop %v310
        %v367 = vmul.f32 %v366, 0.6931472
        %v368 = vlog2.pop %v311
        %v369 = vmul.f32 %v368, 0.6931472
        %v370 = vlog2.pop %v312
        %v371 = vmul.f32 %v370, 0.6931472
        %v372 = vlog2.pop %v313
        %v373 = vmul.f32 %v372, 0.6931472
        %v374 = vlog2.pop %v314
        %v375 = vmul.f32 %v374, 0.6931472
        %v376 = vlog2.pop %v315
        %v377 = vmul.f32 %v376, 0.6931472
        %v378 = vlog2.pop %v316
        %v379 = vmul.f32 %v378, 0.6931472
        %v380 = vlog2.pop %v317
        %v381 = vmul.f32 %v380, 0.6931472
        %v382 = vmax.f32 %v319, -100.0
        %v383 = vmax.f32 %v321, -100.0
        %v384 = vmax.f32 %v323, -100.0
        %v385 = vmax.f32 %v325, -100.0
        %v386 = vmax.f32 %v327, -100.0
        %v387 = vmax.f32 %v329, -100.0
        %v388 = vmax.f32 %v331, -100.0
        %v389 = vmax.f32 %v333, -100.0
        %v390 = vmax.f32 %v335, -100.0
        %v391 = vmax.f32 %v337, -100.0
        %v392 = vmax.f32 %v339, -100.0
        %v393 = vmax.f32 %v341, -100.0
        %v394 = vmax.f32 %v343, -100.0
        %v395 = vmax.f32 %v345, -100.0
        %v396 = vmax.f32 %v347, -100.0
        %v397 = vmax.f32 %v349, -100.0
        %v398 = vmax.f32 %v351, -100.0
        %v399 = vmax.f32 %v353, -100.0
        %v400 = vmax.f32 %v355, -100.0
        %v401 = vmax.f32 %v357, -100.0
        %v402 = vmax.f32 %v359, -100.0
        %v403 = vmax.f32 %v361, -100.0
        %v404 = vmax.f32 %v363, -100.0
        %v405 = vmax.f32 %v365, -100.0
        %v406 = vmax.f32 %v367, -100.0
        %v407 = vmax.f32 %v369, -100.0
        %v408 = vmax.f32 %v371, -100.0
        %v409 = vmax.f32 %v373, -100.0
        %v410 = vmax.f32 %v375, -100.0
        %v411 = vmax.f32 %v377, -100.0
        %v412 = vmax.f32 %v379, -100.0
        %v413 = vmax.f32 %v381, -100.0
        %v414 = vsub.f32 1.0, %v286
        %v415 = vsub.f32 1.0, %v287
        %v416 = vsub.f32 1.0, %v288
        %v417 = vsub.f32 1.0, %v289
        %v418 = vsub.f32 1.0, %v290
        %v419 = vsub.f32 1.0, %v291
        %v420 = vsub.f32 1.0, %v292
        %v421 = vsub.f32 1.0, %v293
        %v422 = vsub.f32 1.0, %v294
        %v423 = vsub.f32 1.0, %v295
        %v424 = vsub.f32 1.0, %v296
        %v425 = vsub.f32 1.0, %v297
        %v426 = vsub.f32 1.0, %v298
        %v427 = vsub.f32 1.0, %v299
        %v428 = vsub.f32 1.0, %v300
        %v429 = vsub.f32 1.0, %v301
        %v430 = vsub.f32 1.0, %v302
        %v431 = vsub.f32 1.0, %v303
        %v432 = vsub.f32 1.0, %v304
        %v433 = vsub.f32 1.0, %v305
        %v434 = vsub.f32 1.0, %v306
        %v435 = vsub.f32 1.0, %v307
        %v436 = vsub.f32 1.0, %v308
        %v437 = vsub.f32 1.0, %v309
        %v438 = vsub.f32 1.0, %v310
        %v439 = vsub.f32 1.0, %v311
        %v440 = vsub.f32 1.0, %v312
        %v441 = vsub.f32 1.0, %v313
        %v442 = vsub.f32 1.0, %v314
        %v443 = vsub.f32 1.0, %v315
        %v444 = vsub.f32 1.0, %v316
        %v445 = vsub.f32 1.0, %v317
        %v446 = vlog2.pop %v414
        %v447 = vmul.f32 %v446, 0.6931472
        %v448 = vlog2.pop %v415
        %v449 = vmul.f32 %v448, 0.6931472
        %v450 = vlog2.pop %v416
        %v451 = vmul.f32 %v450, 0.6931472
        %v452 = vlog2.pop %v417
        %v453 = vmul.f32 %v452, 0.6931472
        %v454 = vlog2.pop %v418
        %v455 = vmul.f32 %v454, 0.6931472
        %v456 = vlog2.pop %v419
        %v457 = vmul.f32 %v456, 0.6931472
        %v458 = vlog2.pop %v420
        %v459 = vmul.f32 %v458, 0.6931472
        %v460 = vlog2.pop %v421
        %v461 = vmul.f32 %v460, 0.6931472
        %v462 = vlog2.pop %v422
        %v463 = vmul.f32 %v462, 0.6931472
        %v464 = vlog2.pop %v423
        %v465 = vmul.f32 %v464, 0.6931472
        %v466 = vlog2.pop %v424
        %v467 = vmul.f32 %v466, 0.6931472
        %v468 = vlog2.pop %v425
        %v469 = vmul.f32 %v468, 0.6931472
        %v470 = vlog2.pop %v426
        %v471 = vmul.f32 %v470, 0.6931472
        %v472 = vlog2.pop %v427
        %v473 = vmul.f32 %v472, 0.6931472
        %v474 = vlog2.pop %v428
        %v475 = vmul.f32 %v474, 0.6931472
        %v476 = vlog2.pop %v429
        %v477 = vmul.f32 %v476, 0.6931472
        %v478 = vlog2.pop %v430
        %v479 = vmul.f32 %v478, 0.6931472
        %v480 = vlog2.pop %v431
        %v481 = vmul.f32 %v480, 0.6931472
        %v482 = vlog2.pop %v432
        %v483 = vmul.f32 %v482, 0.6931472
        %v484 = vlog2.pop %v433
        %v485 = vmul.f32 %v484, 0.6931472
        %v486 = vlog2.pop %v434
        %v487 = vmul.f32 %v486, 0.6931472
        %v488 = vlog2.pop %v435
        %v489 = vmul.f32 %v488, 0.6931472
        %v490 = vlog2.pop %v436
        %v491 = vmul.f32 %v490, 0.6931472
        %v492 = vlog2.pop %v437
        %v493 = vmul.f32 %v492, 0.6931472
        %v494 = vlog2.pop %v438
        %v495 = vmul.f32 %v494, 0.6931472
        %v496 = vlog2.pop %v439
        %v497 = vmul.f32 %v496, 0.6931472
        %v498 = vlog2.pop %v440
        %v499 = vmul.f32 %v498, 0.6931472
        %v500 = vlog2.pop %v441
        %v501 = vmul.f32 %v500, 0.6931472
        %v502 = vlog2.pop %v442
        %v503 = vmul.f32 %v502, 0.6931472
        %v504 = vlog2.pop %v443
        %v505 = vmul.f32 %v504, 0.6931472
        %v506 = vlog2.pop %v444
        %v507 = vmul.f32 %v506, 0.6931472
        %v508 = vlog2.pop %v445
        %v509 = vmul.f32 %v508, 0.6931472
        %v510 = vmax.f32 %v447, -100.0
        %v511 = vmax.f32 %v449, -100.0
        %v512 = vmax.f32 %v451, -100.0
        %v513 = vmax.f32 %v453, -100.0
        %v514 = vmax.f32 %v455, -100.0
        %v515 = vmax.f32 %v457, -100.0
        %v516 = vmax.f32 %v459, -100.0
        %v517 = vmax.f32 %v461, -100.0
        %v518 = vmax.f32 %v463, -100.0
        %v519 = vmax.f32 %v465, -100.0
        %v520 = vmax.f32 %v467, -100.0
        %v521 = vmax.f32 %v469, -100.0
        %v522 = vmax.f32 %v471, -100.0
        %v523 = vmax.f32 %v473, -100.0
        %v524 = vmax.f32 %v475, -100.0
        %v525 = vmax.f32 %v477, -100.0
        %v526 = vmax.f32 %v479, -100.0
        %v527 = vmax.f32 %v481, -100.0
        %v528 = vmax.f32 %v483, -100.0
        %v529 = vmax.f32 %v485, -100.0
        %v530 = vmax.f32 %v487, -100.0
        %v531 = vmax.f32 %v489, -100.0
        %v532 = vmax.f32 %v491, -100.0
        %v533 = vmax.f32 %v493, -100.0
        %v534 = vmax.f32 %v495, -100.0
        %v535 = vmax.f32 %v497, -100.0
        %v536 = vmax.f32 %v499, -100.0
        %v537 = vmax.f32 %v501, -100.0
        %v538 = vmax.f32 %v503, -100.0
        %v539 = vmax.f32 %v505, -100.0
        %v540 = vmax.f32 %v507, -100.0
        %v541 = vmax.f32 %v509, -100.0
        %v542 = vmul.f32 %v254, %v382
        %v543 = vmul.f32 %v255, %v383
        %v544 = vmul.f32 %v256, %v384
        %v545 = vmul.f32 %v257, %v385
        %v546 = vmul.f32 %v258, %v386
        %v547 = vmul.f32 %v259, %v387
        %v548 = vmul.f32 %v260, %v388
        %v549 = vmul.f32 %v261, %v389
        %v550 = vmul.f32 %v262, %v390
        %v551 = vmul.f32 %v263, %v391
        %v552 = vmul.f32 %v264, %v392
        %v553 = vmul.f32 %v265, %v393
        %v554 = vmul.f32 %v266, %v394
        %v555 = vmul.f32 %v267, %v395
        %v556 = vmul.f32 %v268, %v396
        %v557 = vmul.f32 %v269, %v397
        %v558 = vmul.f32 %v270, %v398
        %v559 = vmul.f32 %v271, %v399
        %v560 = vmul.f32 %v272, %v400
        %v561 = vmul.f32 %v273, %v401
        %v562 = vmul.f32 %v274, %v402
        %v563 = vmul.f32 %v275, %v403
        %v564 = vmul.f32 %v276, %v404
        %v565 = vmul.f32 %v277, %v405
        %v566 = vmul.f32 %v278, %v406
        %v567 = vmul.f32 %v279, %v407
        %v568 = vmul.f32 %v280, %v408
        %v569 = vmul.f32 %v281, %v409
        %v570 = vmul.f32 %v282, %v410
        %v571 = vmul.f32 %v283, %v411
        %v572 = vmul.f32 %v284, %v412
        %v573 = vmul.f32 %v285, %v413
        %v574 = vsub.f32 1.0, %v254
        %v575 = vsub.f32 1.0, %v255
        %v576 = vsub.f32 1.0, %v256
        %v577 = vsub.f32 1.0, %v257
        %v578 = vsub.f32 1.0, %v258
        %v579 = vsub.f32 1.0, %v259
        %v580 = vsub.f32 1.0, %v260
        %v581 = vsub.f32 1.0, %v261
        %v582 = vsub.f32 1.0, %v262
        %v583 = vsub.f32 1.0, %v263
        %v584 = vsub.f32 1.0, %v264
        %v585 = vsub.f32 1.0, %v265
        %v586 = vsub.f32 1.0, %v266
        %v587 = vsub.f32 1.0, %v267
        %v588 = vsub.f32 1.0, %v268
        %v589 = vsub.f32 1.0, %v269
        %v590 = vsub.f32 1.0, %v270
        %v591 = vsub.f32 1.0, %v271
        %v592 = vsub.f32 1.0, %v272
        %v593 = vsub.f32 1.0, %v273
        %v594 = vsub.f32 1.0, %v274
        %v595 = vsub.f32 1.0, %v275
        %v596 = vsub.f32 1.0, %v276
        %v597 = vsub.f32 1.0, %v277
        %v598 = vsub.f32 1.0, %v278
        %v599 = vsub.f32 1.0, %v279
        %v600 = vsub.f32 1.0, %v280
        %v601 = vsub.f32 1.0, %v281
        %v602 = vsub.f32 1.0, %v282
        %v603 = vsub.f32 1.0, %v283
        %v604 = vsub.f32 1.0, %v284
        %v605 = vsub.f32 1.0, %v285
        %v606 = vmul.f32 %v574, %v510
        %v607 = vmul.f32 %v575, %v511
        %v608 = vmul.f32 %v576, %v512
        %v609 = vmul.f32 %v577, %v513
        %v610 = vmul.f32 %v578, %v514
        %v611 = vmul.f32 %v579, %v515
        %v612 = vmul.f32 %v580, %v516
        %v613 = vmul.f32 %v581, %v517
        %v614 = vmul.f32 %v582, %v518
        %v615 = vmul.f32 %v583, %v519
        %v616 = vmul.f32 %v584, %v520
        %v617 = vmul.f32 %v585, %v521
        %v618 = vmul.f32 %v586, %v522
        %v619 = vmul.f32 %v587, %v523
        %v620 = vmul.f32 %v588, %v524
        %v621 = vmul.f32 %v589, %v525
        %v622 = vmul.f32 %v590, %v526
        %v623 = vmul.f32 %v591, %v527
        %v624 = vmul.f32 %v592, %v528
        %v625 = vmul.f32 %v593, %v529
        %v626 = vmul.f32 %v594, %v530
        %v627 = vmul.f32 %v595, %v531
        %v628 = vmul.f32 %v596, %v532
        %v629 = vmul.f32 %v597, %v533
        %v630 = vmul.f32 %v598, %v534
        %v631 = vmul.f32 %v599, %v535
        %v632 = vmul.f32 %v600, %v536
        %v633 = vmul.f32 %v601, %v537
        %v634 = vmul.f32 %v602, %v538
        %v635 = vmul.f32 %v603, %v539
        %v636 = vmul.f32 %v604, %v540
        %v637 = vmul.f32 %v605, %v541
        %v638 = vadd.f32 %v542, %v606
        %v639 = vadd.f32 %v543, %v607
        %v640 = vadd.f32 %v544, %v608
        %v641 = vadd.f32 %v545, %v609
        %v642 = vadd.f32 %v546, %v610
        %v643 = vadd.f32 %v547, %v611
        %v644 = vadd.f32 %v548, %v612
        %v645 = vadd.f32 %v549, %v613
        %v646 = vadd.f32 %v550, %v614
        %v647 = vadd.f32 %v551, %v615
        %v648 = vadd.f32 %v552, %v616
        %v649 = vadd.f32 %v553, %v617
        %v650 = vadd.f32 %v554, %v618
        %v651 = vadd.f32 %v555, %v619
        %v652 = vadd.f32 %v556, %v620
        %v653 = vadd.f32 %v557, %v621
        %v654 = vadd.f32 %v558, %v622
        %v655 = vadd.f32 %v559, %v623
        %v656 = vadd.f32 %v560, %v624
        %v657 = vadd.f32 %v561, %v625
        %v658 = vadd.f32 %v562, %v626
        %v659 = vadd.f32 %v563, %v627
        %v660 = vadd.f32 %v564, %v628
        %v661 = vadd.f32 %v565, %v629
        %v662 = vadd.f32 %v566, %v630
        %v663 = vadd.f32 %v567, %v631
        %v664 = vadd.f32 %v568, %v632
        %v665 = vadd.f32 %v569, %v633
        %v666 = vadd.f32 %v570, %v634
        %v667 = vadd.f32 %v571, %v635
        %v668 = vadd.f32 %v572, %v636
        %v669 = vadd.f32 %v573, %v637
        %v670 = vsub.f32 0.0, %v638
        %v671 = vsub.f32 0.0, %v639
        %v672 = vsub.f32 0.0, %v640
        %v673 = vsub.f32 0.0, %v641
        %v674 = vsub.f32 0.0, %v642
        %v675 = vsub.f32 0.0, %v643
        %v676 = vsub.f32 0.0, %v644
        %v677 = vsub.f32 0.0, %v645
        %v678 = vsub.f32 0.0, %v646
        %v679 = vsub.f32 0.0, %v647
        %v680 = vsub.f32 0.0, %v648
        %v681 = vsub.f32 0.0, %v649
        %v682 = vsub.f32 0.0, %v650
        %v683 = vsub.f32 0.0, %v651
        %v684 = vsub.f32 0.0, %v652
        %v685 = vsub.f32 0.0, %v653
        %v686 = vsub.f32 0.0, %v654
        %v687 = vsub.f32 0.0, %v655
        %v688 = vsub.f32 0.0, %v656
        %v689 = vsub.f32 0.0, %v657
        %v690 = vsub.f32 0.0, %v658
        %v691 = vsub.f32 0.0, %v659
        %v692 = vsub.f32 0.0, %v660
        %v693 = vsub.f32 0.0, %v661
        %v694 = vsub.f32 0.0, %v662
        %v695 = vsub.f32 0.0, %v663
        %v696 = vsub.f32 0.0, %v664
        %v697 = vsub.f32 0.0, %v665
        %v698 = vsub.f32 0.0, %v666
        %v699 = vsub.f32 0.0, %v667
        %v700 = vsub.f32 0.0, %v668
        %v701 = vsub.f32 0.0, %v669
        %s702 = smul.u32 %s24, 4
        %s703 = sadd.s32 %s702, %s25
        %s704 = smul.u32 %s703, 256
        %s705 = sadd.s32 %s704, 256
        %s706 = smul.u32 %s705, 128
        %p707 = scmp.gt.s32.totalorder %s706, 131072
        %p708 = scmp.le.s32.totalorder %s706, 131072
        // Predicated region
        $region41: #{tpu_custom_call.1} parent=27 // pred_check
          %p709 = pneg %p708
        $region42: #{tpu_custom_call.1} parent=27 // pred_check_branch
          %711 = sbr.rel (%p709) target = $region44
        $region43: #{tpu_custom_call.1} parent=27 // pred_region
          %v712 = vld [vmem:[#allocation7] sm:$0xff]
          %v713 = vld [vmem:[#allocation7 + $0x8] sm:$0xff]
          %v714 = vld [vmem:[#allocation7 + $0x10] sm:$0xff]
          %v715 = vld [vmem:[#allocation7 + $0x18] sm:$0xff]
          %v716 = vadd.f32 %v670, %v674
          %v717 = vadd.f32 %v716, %v678
          %v718 = vadd.f32 %v717, %v682
          %v719 = vadd.f32 %v718, %v686
          %v720 = vadd.f32 %v719, %v690
          %v721 = vadd.f32 %v720, %v694
          %v722 = vadd.f32 %v721, %v698
          %v723 = vadd.f32 %v671, %v675
          %v724 = vadd.f32 %v723, %v679
          %v725 = vadd.f32 %v724, %v683
          %v726 = vadd.f32 %v725, %v687
          %v727 = vadd.f32 %v726, %v691
          %v728 = vadd.f32 %v727, %v695
          %v729 = vadd.f32 %v728, %v699
          %v730 = vadd.f32 %v672, %v676
          %v731 = vadd.f32 %v730, %v680
          %v732 = vadd.f32 %v731, %v684
          %v733 = vadd.f32 %v732, %v688
          %v734 = vadd.f32 %v733, %v692
          %v735 = vadd.f32 %v734, %v696
          %v736 = vadd.f32 %v735, %v700
          %v737 = vadd.f32 %v673, %v677
          %v738 = vadd.f32 %v737, %v681
          %v739 = vadd.f32 %v738, %v685
          %v740 = vadd.f32 %v739, %v689
          %v741 = vadd.f32 %v740, %v693
          %v742 = vadd.f32 %v741, %v697
          %v743 = vadd.f32 %v742, %v701
          %v744 = vadd.f32 %v712, %v722
          %v745 = vadd.f32 %v713, %v729
          %v746 = vadd.f32 %v714, %v736
          %v747 = vadd.f32 %v715, %v743
          %748 = vst [vmem:[#allocation7] sm:$0xff] %v744
          %749 = vst [vmem:[#allocation7 + $0x8] sm:$0xff] %v745
          %750 = vst [vmem:[#allocation7 + $0x10] sm:$0xff] %v746
          %751 = vst [vmem:[#allocation7 + $0x18] sm:$0xff] %v747
        $region44: #{tpu_custom_call.1} parent=27 // pred_fallthru
          _
        // Predicated region
        $region45: #{tpu_custom_call.1} parent=27 // pred_check
          %p752 = pneg %p707
        $region46: #{tpu_custom_call.1} parent=27 // pred_check_branch
          %754 = sbr.rel (%p752) target = $region48
        $region47: #{tpu_custom_call.1} parent=27 // pred_region
          %v755 = vlaneseq
          %v756 = vshrl.u32 %v755, 7
          %v757 = vadd.s32 %v756, 8
          %v758 = vadd.s32 %v756, 16
          %v759 = vadd.s32 %v756, 24
          %v760 = vadd.s32 %v756, 32
          %v761 = vadd.s32 %v756, 40
          %v762 = vadd.s32 %v756, 48
          %v763 = vadd.s32 %v756, 56
          %v764 = vadd.s32 %v756, 64
          %v765 = vadd.s32 %v756, 72
          %v766 = vadd.s32 %v756, 80
          %v767 = vadd.s32 %v756, 88
          %v768 = vadd.s32 %v756, 96
          %v769 = vadd.s32 %v756, 104
          %v770 = vadd.s32 %v756, 112
          %v771 = vadd.s32 %v756, 120
          %v772 = vadd.s32 %v756, 128
          %v773 = vadd.s32 %v756, 136
          %v774 = vadd.s32 %v756, 144
          %v775 = vadd.s32 %v756, 152
          %v776 = vadd.s32 %v756, 160
          %v777 = vadd.s32 %v756, 168
          %v778 = vadd.s32 %v756, 176
          %v779 = vadd.s32 %v756, 184
          %v780 = vadd.s32 %v756, 192
          %v781 = vadd.s32 %v756, 200
          %v782 = vadd.s32 %v756, 208
          %v783 = vadd.s32 %v756, 216
          %v784 = vadd.s32 %v756, 224
          %v785 = vadd.s32 %v756, 232
          %v786 = vadd.s32 %v756, 240
          %v787 = vadd.s32 %v756, 248
          %v788 = vlaneseq
          %v789 = vand.u32 %v788, 127
          %v790 = vstv %s704
          %v791 = vadd.s32 %v790, %v756
          %v792 = vadd.s32 %v790, %v757
          %v793 = vadd.s32 %v790, %v758
          %v794 = vadd.s32 %v790, %v759
          %v795 = vadd.s32 %v790, %v760
          %v796 = vadd.s32 %v790, %v761
          %v797 = vadd.s32 %v790, %v762
          %v798 = vadd.s32 %v790, %v763
          %v799 = vadd.s32 %v790, %v764
          %v800 = vadd.s32 %v790, %v765
          %v801 = vadd.s32 %v790, %v766
          %v802 = vadd.s32 %v790, %v767
          %v803 = vadd.s32 %v790, %v768
          %v804 = vadd.s32 %v790, %v769
          %v805 = vadd.s32 %v790, %v770
          %v806 = vadd.s32 %v790, %v771
          %v807 = vadd.s32 %v790, %v772
          %v808 = vadd.s32 %v790, %v773
          %v809 = vadd.s32 %v790, %v774
          %v810 = vadd.s32 %v790, %v775
          %v811 = vadd.s32 %v790, %v776
          %v812 = vadd.s32 %v790, %v777
          %v813 = vadd.s32 %v790, %v778
          %v814 = vadd.s32 %v790, %v779
          %v815 = vadd.s32 %v790, %v780
          %v816 = vadd.s32 %v790, %v781
          %v817 = vadd.s32 %v790, %v782
          %v818 = vadd.s32 %v790, %v783
          %v819 = vadd.s32 %v790, %v784
          %v820 = vadd.s32 %v790, %v785
          %v821 = vadd.s32 %v790, %v786
          %v822 = vadd.s32 %v790, %v787
          %v823 = vmul.u32 %v791, 128
          %v824 = vmul.u32 %v792, 128
          %v825 = vmul.u32 %v793, 128
          %v826 = vmul.u32 %v794, 128
          %v827 = vmul.u32 %v795, 128
          %v828 = vmul.u32 %v796, 128
          %v829 = vmul.u32 %v797, 128
          %v830 = vmul.u32 %v798, 128
          %v831 = vmul.u32 %v799, 128
          %v832 = vmul.u32 %v800, 128
          %v833 = vmul.u32 %v801, 128
          %v834 = vmul.u32 %v802, 128
          %v835 = vmul.u32 %v803, 128
          %v836 = vmul.u32 %v804, 128
          %v837 = vmul.u32 %v805, 128
          %v838 = vmul.u32 %v806, 128
          %v839 = vmul.u32 %v807, 128
          %v840 = vmul.u32 %v808, 128
          %v841 = vmul.u32 %v809, 128
          %v842 = vmul.u32 %v810, 128
          %v843 = vmul.u32 %v811, 128
          %v844 = vmul.u32 %v812, 128
          %v845 = vmul.u32 %v813, 128
          %v846 = vmul.u32 %v814, 128
          %v847 = vmul.u32 %v815, 128
          %v848 = vmul.u32 %v816, 128
          %v849 = vmul.u32 %v817, 128
          %v850 = vmul.u32 %v818, 128
          %v851 = vmul.u32 %v819, 128
          %v852 = vmul.u32 %v820, 128
          %v853 = vmul.u32 %v821, 128
          %v854 = vmul.u32 %v822, 128
          %v855 = vadd.s32 %v823, %v789
          %v856 = vadd.s32 %v824, %v789
          %v857 = vadd.s32 %v825, %v789
          %v858 = vadd.s32 %v826, %v789
          %v859 = vadd.s32 %v827, %v789
          %v860 = vadd.s32 %v828, %v789
          %v861 = vadd.s32 %v829, %v789
          %v862 = vadd.s32 %v830, %v789
          %v863 = vadd.s32 %v831, %v789
          %v864 = vadd.s32 %v832, %v789
          %v865 = vadd.s32 %v833, %v789
          %v866 = vadd.s32 %v834, %v789
          %v867 = vadd.s32 %v835, %v789
          %v868 = vadd.s32 %v836, %v789
          %v869 = vadd.s32 %v837, %v789
          %v870 = vadd.s32 %v838, %v789
          %v871 = vadd.s32 %v839, %v789
          %v872 = vadd.s32 %v840, %v789
          %v873 = vadd.s32 %v841, %v789
          %v874 = vadd.s32 %v842, %v789
          %v875 = vadd.s32 %v843, %v789
          %v876 = vadd.s32 %v844, %v789
          %v877 = vadd.s32 %v845, %v789
          %v878 = vadd.s32 %v846, %v789
          %v879 = vadd.s32 %v847, %v789
          %v880 = vadd.s32 %v848, %v789
          %v881 = vadd.s32 %v849, %v789
          %v882 = vadd.s32 %v850, %v789
          %v883 = vadd.s32 %v851, %v789
          %v884 = vadd.s32 %v852, %v789
          %v885 = vadd.s32 %v853, %v789
          %v886 = vadd.s32 %v854, %v789
          %vm887 = vcmp.lt.s32.totalorder %v855, 131072
          %vm888 = vcmp.lt.s32.totalorder %v856, 131072
          %vm889 = vcmp.lt.s32.totalorder %v857, 131072
          %vm890 = vcmp.lt.s32.totalorder %v858, 131072
          %vm891 = vcmp.lt.s32.totalorder %v859, 131072
          %vm892 = vcmp.lt.s32.totalorder %v860, 131072
          %vm893 = vcmp.lt.s32.totalorder %v861, 131072
          %vm894 = vcmp.lt.s32.totalorder %v862, 131072
          %vm895 = vcmp.lt.s32.totalorder %v863, 131072
          %vm896 = vcmp.lt.s32.totalorder %v864, 131072
          %vm897 = vcmp.lt.s32.totalorder %v865, 131072
          %vm898 = vcmp.lt.s32.totalorder %v866, 131072
          %vm899 = vcmp.lt.s32.totalorder %v867, 131072
          %vm900 = vcmp.lt.s32.totalorder %v868, 131072
          %vm901 = vcmp.lt.s32.totalorder %v869, 131072
          %vm902 = vcmp.lt.s32.totalorder %v870, 131072
          %vm903 = vcmp.lt.s32.totalorder %v871, 131072
          %vm904 = vcmp.lt.s32.totalorder %v872, 131072
          %vm905 = vcmp.lt.s32.totalorder %v873, 131072
          %vm906 = vcmp.lt.s32.totalorder %v874, 131072
          %vm907 = vcmp.lt.s32.totalorder %v875, 131072
          %vm908 = vcmp.lt.s32.totalorder %v876, 131072
          %vm909 = vcmp.lt.s32.totalorder %v877, 131072
          %vm910 = vcmp.lt.s32.totalorder %v878, 131072
          %vm911 = vcmp.lt.s32.totalorder %v879, 131072
          %vm912 = vcmp.lt.s32.totalorder %v880, 131072
          %vm913 = vcmp.lt.s32.totalorder %v881, 131072
          %vm914 = vcmp.lt.s32.totalorder %v882, 131072
          %vm915 = vcmp.lt.s32.totalorder %v883, 131072
          %vm916 = vcmp.lt.s32.totalorder %v884, 131072
          %vm917 = vcmp.lt.s32.totalorder %v885, 131072
          %vm918 = vcmp.lt.s32.totalorder %v886, 131072
          %v919 = vsel %vm887, %v670, 0.0
          %v920 = vsel %vm888, %v671, 0.0
          %v921 = vsel %vm889, %v672, 0.0
          %v922 = vsel %vm890, %v673, 0.0
          %v923 = vsel %vm891, %v674, 0.0
          %v924 = vsel %vm892, %v675, 0.0
          %v925 = vsel %vm893, %v676, 0.0
          %v926 = vsel %vm894, %v677, 0.0
          %v927 = vsel %vm895, %v678, 0.0
          %v928 = vsel %vm896, %v679, 0.0
          %v929 = vsel %vm897, %v680, 0.0
          %v930 = vsel %vm898, %v681, 0.0
          %v931 = vsel %vm899, %v682, 0.0
          %v932 = vsel %vm900, %v683, 0.0
          %v933 = vsel %vm901, %v684, 0.0
          %v934 = vsel %vm902, %v685, 0.0
          %v935 = vsel %vm903, %v686, 0.0
          %v936 = vsel %vm904, %v687, 0.0
          %v937 = vsel %vm905, %v688, 0.0
          %v938 = vsel %vm906, %v689, 0.0
          %v939 = vsel %vm907, %v690, 0.0
          %v940 = vsel %vm908, %v691, 0.0
          %v941 = vsel %vm909, %v692, 0.0
          %v942 = vsel %vm910, %v693, 0.0
          %v943 = vsel %vm911, %v694, 0.0
          %v944 = vsel %vm912, %v695, 0.0
          %v945 = vsel %vm913, %v696, 0.0
          %v946 = vsel %vm914, %v697, 0.0
          %v947 = vsel %vm915, %v698, 0.0
          %v948 = vsel %vm916, %v699, 0.0
          %v949 = vsel %vm917, %v700, 0.0
          %v950 = vsel %vm918, %v701, 0.0
          %v951 = vld [vmem:[#allocation7] sm:$0xff]
          %v952 = vld [vmem:[#allocation7 + $0x8] sm:$0xff]
          %v953 = vld [vmem:[#allocation7 + $0x10] sm:$0xff]
          %v954 = vld [vmem:[#allocation7 + $0x18] sm:$0xff]
          %v955 = vadd.f32 %v919, %v923
          %v956 = vadd.f32 %v955, %v927
          %v957 = vadd.f32 %v956, %v931
          %v958 = vadd.f32 %v957, %v935
          %v959 = vadd.f32 %v958, %v939
          %v960 = vadd.f32 %v959, %v943
          %v961 = vadd.f32 %v960, %v947
          %v962 = vadd.f32 %v920, %v924
          %v963 = vadd.f32 %v962, %v928
          %v964 = vadd.f32 %v963, %v932
          %v965 = vadd.f32 %v964, %v936
          %v966 = vadd.f32 %v965, %v940
          %v967 = vadd.f32 %v966, %v944
          %v968 = vadd.f32 %v967, %v948
          %v969 = vadd.f32 %v921, %v925
          %v970 = vadd.f32 %v969, %v929
          %v971 = vadd.f32 %v970, %v933
          %v972 = vadd.f32 %v971, %v937
          %v973 = vadd.f32 %v972, %v941
          %v974 = vadd.f32 %v973, %v945
          %v975 = vadd.f32 %v974, %v949
          %v976 = vadd.f32 %v922, %v926
          %v977 = vadd.f32 %v976, %v930
          %v978 = vadd.f32 %v977, %v934
          %v979 = vadd.f32 %v978, %v938
          %v980 = vadd.f32 %v979, %v942
          %v981 = vadd.f32 %v980, %v946
          %v982 = vadd.f32 %v981, %v950
          %v983 = vadd.f32 %v951, %v961
          %v984 = vadd.f32 %v952, %v968
          %v985 = vadd.f32 %v953, %v975
          %v986 = vadd.f32 %v954, %v982
          %987 = vst [vmem:[#allocation7] sm:$0xff] %v983
          %988 = vst [vmem:[#allocation7 + $0x8] sm:$0xff] %v984
          %989 = vst [vmem:[#allocation7 + $0x10] sm:$0xff] %v985
          %990 = vst [vmem:[#allocation7 + $0x18] sm:$0xff] %v986
        $region48: #{tpu_custom_call.1} parent=27 // pred_fallthru
          _
        // Predicated region
        $region49: #{tpu_custom_call.1} parent=27 // pred_check
          %p991 = pneg %p118
        $region50: #{tpu_custom_call.1} parent=27 // pred_check_branch
          %993 = sbr.rel (%p991) target = $region52
        $region51: #{tpu_custom_call.1} parent=27 // pred_region
          %s994 = smul.u32 4, %s24
          %996 = vsyncadd [#allocation4], 0
          %s997 = smul.addr %s994, 8
          %s998 = scalar_lea.hbm %s2, %s997
          %s999 = sshll.u32 [#allocation7], 4
          %s1000 = int_to_ptr.vmem [resolvable:$true] %s999
          %s1001 = sshll.u32 %s998, 4
          %s1002 = int_to_ptr.hbm [resolvable:$true] %s1001
          %1007 = dma.vmem_to_hbm [thread:$0]  %s1000, 512, %s1002, [#allocation4], 128, 128, 8
        $region52: #{tpu_custom_call.1} parent=27 // pred_fallthru
          _
        // Predicated region
        $region53: #{tpu_custom_call.1} parent=27 // pred_check
          %p1008 = pneg %p118
        $region54: #{tpu_custom_call.1} parent=27 // pred_check_branch
          %1010 = sbr.rel (%p1008) target = $region56
        $region55: #{tpu_custom_call.1} parent=27 // pred_region
          %1012 = dma.done [#allocation4], 512
        $region56: #{tpu_custom_call.1} parent=27 // pred_fallthru
          _
      $region28: #{tpu_custom_call.1} parent=5 // pred_fallthru
        _
      %p1013 = scmp.le.s32.totalorder 2, %s15
      // Predicated region
      $region57: #{tpu_custom_call.1} parent=5 // pred_check
        %p1014 = pneg %p1013
      $region58: #{tpu_custom_call.1} parent=5 // pred_check_branch
        %1016 = sbr.rel (%p1014) target = $region60
      $region59: #{tpu_custom_call.1} parent=5 // pred_region
        %s1017 = ssub.s32 %s15, 2
      $region60: #{tpu_custom_call.1} parent=5 // pred_fallthru
        _
    $region6: #{tpu_custom_call.1} parent=1 // loop_footer
      %s19 = sadd.s32 1, %s15
    $region7: #{tpu_custom_call.1} parent=1 // loop_footer_branch
      %14 = sbr.rel target = $region3
    $region8: #{tpu_custom_call.1} parent=1 // loop_exit
      _
    %1018 = vsyncpa [#allocation3], 1
    %s1019 = scalar_lea.sflag [#allocation3], 1
    %1020 = vsyncpa %s1019, 1
    %1021 = vsyncpa [#allocation6], 1
    %s1022 = scalar_lea.sflag [#allocation6], 1
    %1023 = vsyncpa %s1022, 1
    %1024 = vsyncpa [#allocation4], 1
    %s1025 = scalar_lea.sflag [#allocation4], 1
    %1026 = vsyncpa %s1025, 1

</llo_original>
